<compile_context>
chip_gen: v5e
topology: v5e:2x2
jax: 0.10.0
libtpu: 0.0.40
codegen_flags: <defaults>
</compile_context>

<pallas_src>
import functools

import jax
import jax.numpy as jnp
from jax.experimental import pallas as pl
from jax.experimental.pallas import tpu as pltpu


def _fused_qk_proj_kernel(x_ref, w_ref, b_ref, o_ref):
    """One (row-tile, col-tile) step of the fused projection.

    x_ref : (tile_m, E)       input rows
    w_ref : (E, tile_n)       column slab of [Wq | Wk]^T  (already transposed)
    b_ref : (1, tile_n)       matching slab of [bq | bk]
    o_ref : (tile_m, tile_n)  x @ w + b   (single fused, lane-dense store)
    """
    y = jnp.dot(x_ref[...], w_ref[...], preferred_element_type=jnp.float32)
    o_ref[...] = (y + b_ref[...]).astype(o_ref.dtype)


def _vmem_budget():
    """Per-generation VMEM budget (bytes) with a safe fallback."""
    try:
        cap = getattr(pltpu.get_tpu_info(), "vmem_capacity_bytes", 64 * 1024 * 1024)
    except Exception:  # no TPU info at trace time -> conservative default
        cap = 64 * 1024 * 1024
    # Use ~1/3 of physical VMEM, never less than 20 MiB, never more than 80 MiB.
    return int(min(max(cap // 3, 20 * 1024 * 1024), 80 * 1024 * 1024))


def _pick_tiles(rows, embed_dim, dtype_bytes, vmem_budget):
    """Choose (tile_m, tile_n, sublane_multiple) for the fused projection."""
    two_e = 2 * embed_dim
    packing = max(1, 4 // dtype_bytes)
    sub = 8 * packing  # packed-sublane multiple: 8 f32, 16 bf16, 32 int8/fp8

    # --- tile_n: output-column tile over the fused (2E) dim -------------------
    # Budget the weight slab as double-buffered even if Mosaic keeps the
    # constant-index_map case resident (conservative).
    w_cost = lambda tn: embed_dim * tn * dtype_bytes * 2
    tile_n = two_e
    if w_cost(two_e) > vmem_budget // 3:
        for cand in (1024, 512, 256, 128):  # 256-multiples feed full MXU passes
            if two_e % cand == 0 and w_cost(cand) <= vmem_budget // 3:
                tile_n = cand
                break
        # If nothing divides/fits (odd 2E), fall back to full 2E: correctness first.

    # --- tile_m: row tile from the remaining budget ---------------------------
    fixed = w_cost(tile_n) + tile_n * dtype_bytes * 2          # weight + bias slabs
    per_row = (embed_dim * dtype_bytes * 2                     # x tile (dbl-buffered)
               + tile_n * dtype_bytes * 2                      # out tile (dbl-buffered)
               + tile_n * 4)                                   # live f32 intermediate
    avail = max(vmem_budget - fixed, per_row * sub)
    tile_m = min(int(avail // per_row), 1024)                  # pipeline-overhead knee
    tile_m = max(sub, (tile_m // sub) * sub)

    # Guarantee >= 2 row tiles so the "parallel" axis can shard across v7x's
    # two TensorCores (harmless on 1-TC v5e/v6e).
    if rows > sub:
        half = -(-rows // 2)
        half = -(-half // sub) * sub
        tile_m = min(tile_m, max(sub, half))
    return tile_m, tile_n, sub


@functools.partial(jax.jit, static_argnames=("num_heads",))
def multi_head_attention_layer_forward(inputs, wq, bq, wk, bk, num_heads=8):
    """inputs: (batch, seq, embed_dim). wq/wk: torch layout (out, in). bq/bk: (out,)."""
    batch, seq, embed_dim = inputs.shape
    rows = batch * seq
    dtype_bytes = jnp.dtype(inputs.dtype).itemsize
    two_e = 2 * embed_dim

    x2d = inputs.reshape(rows, embed_dim)

    # One-time wrapper-side fuse + transpose: (E, 2E), output dim lane-major,
    # so the kernel does a canonical (M,K)x(K,N) contraction on the MXU.
    w_qk = jnp.concatenate([wq, wk], axis=0).T                 # (E, 2E)
    b_qk = jnp.concatenate([bq, bk], axis=0).reshape(1, two_e)  # (1, 2E)

    vmem_budget = _vmem_budget()
    tile_m, tile_n, sub = _pick_tiles(rows, embed_dim, dtype_bytes, vmem_budget)

    rows_p = -(-rows // tile_m) * tile_m
    if rows_p != rows:
        x2d = jnp.pad(x2d, ((0, rows_p - rows), (0, 0)))
    grid_m = rows_p // tile_m
    grid_n = two_e // tile_n

    # Explicit scoped-VMEM limit: covers v5e's 16 MiB default, stays well under
    # v7x's 64 MiB physical VMEM.
    footprint = (embed_dim * tile_n * dtype_bytes * 2      # weight slab
                 + tile_n * dtype_bytes * 2                # bias slab
                 + tile_m * embed_dim * dtype_bytes * 2    # x tile
                 + tile_m * tile_n * dtype_bytes * 2       # out tile
                 + tile_m * tile_n * 4)                    # f32 intermediate
    vmem_limit = int(min(max(footprint + (4 << 20), 32 << 20), 48 << 20))

    flops = 2 * rows_p * embed_dim * two_e
    bytes_accessed = (
        rows_p * embed_dim * dtype_bytes * grid_n     # x reads (re-read per col tile)
        + embed_dim * two_e * dtype_bytes             # fused weight read
        + two_e * dtype_bytes                         # fused bias read
        + rows_p * two_e * dtype_bytes                # fused q|k write
    )

    qk_flat = pl.pallas_call(
        _fused_qk_proj_kernel,
        out_shape=jax.ShapeDtypeStruct((rows_p, two_e), inputs.dtype),
        grid=(grid_m, grid_n),
        in_specs=[
            pl.BlockSpec((tile_m, embed_dim), lambda i, j: (i, 0)),   # x rows
            pl.BlockSpec((embed_dim, tile_n), lambda i, j: (0, j)),   # weight slab
            pl.BlockSpec((1, tile_n), lambda i, j: (0, j)),           # bias slab
        ],
        out_specs=pl.BlockSpec((tile_m, tile_n), lambda i, j: (i, j)),
        compiler_params=pltpu.CompilerParams(
            dimension_semantics=("parallel", "parallel"),
            vmem_limit_bytes=vmem_limit,
        ),
        cost_estimate=pl.CostEstimate(
            flops=flops, transcendentals=0, bytes_accessed=bytes_accessed
        ),
    )(x2d, w_qk, b_qk)

    if rows_p != rows:
        qk_flat = qk_flat[:rows]

    q_proj = qk_flat[:, :embed_dim].reshape(batch, seq, embed_dim)
    k_proj = qk_flat[:, embed_dim:].reshape(batch, seq, embed_dim)

    # Per-head minor-dim chunking (tuples of (..., head_dim) tensors) is required
    # by the reference API; it happens outside the kernel so kernel stores stay
    # full-width and lane-dense.
    head_dim = embed_dim // num_heads
    chunk = lambda t: tuple(
        t[..., h * head_dim:(h + 1) * head_dim] for h in range(num_heads)
    )
    # v and q are both wq(inputs) in the reference forward.
    v = chunk(q_proj)
    k = chunk(k_proj)
    q = chunk(q_proj)
    return v, k, q


def _ref_forward(inputs, wq, bq, wk, bk, num_heads):
    """Pure-JAX reference for correctness checking."""
    qp = inputs @ wq.T + bq
    kp = inputs @ wk.T + bk
    head_dim = inputs.shape[-1] // num_heads
    chunk = lambda t: tuple(
        t[..., h * head_dim:(h + 1) * head_dim] for h in range(num_heads)
    )
    return chunk(qp), chunk(kp), chunk(qp)


if __name__ == "__main__":
    embed_dim = 32
    num_heads = 8
    batch, seq = 2, 8

    key = jax.random.PRNGKey(0)
    k_in, k_wq, k_bq, k_wk, k_bk = jax.random.split(key, 5)

    inputs = jax.random.normal(k_in, (batch, seq, embed_dim), dtype=jnp.float32)

    # Deterministic parameter init, matching torch.nn.Linear's U(-1/sqrt(in), 1/sqrt(in)).
    bound = 1.0 / (embed_dim ** 0.5)
    wq = jax.random.uniform(k_wq, (embed_dim, embed_dim), jnp.float32, -bound, bound)
    bq = jax.random.uniform(k_bq, (embed_dim,), jnp.float32, -bound, bound)
    wk = jax.random.uniform(k_wk, (embed_dim, embed_dim), jnp.float32, -bound, bound)
    bk = jax.random.uniform(k_bk, (embed_dim,), jnp.float32, -bound, bound)
    # TODO(synk): wv, dense and dropout exist in __init__ but are unused in forward; omitted.

    v, k, q = multi_head_attention_layer_forward(
        inputs, wq, bq, wk, bk, num_heads=num_heads
    )
    jax.block_until_ready((v, k, q))

    v_ref, k_ref, q_ref = _ref_forward(inputs, wq, bq, wk, bk, num_heads)
    head_dim = embed_dim // num_heads
    for got, want in zip(v + k + q, v_ref + k_ref + q_ref):
        assert got.shape == (batch, seq, head_dim)
        assert jnp.allclose(got, want, atol=1e-5, rtol=1e-5)

    print("KERNEL_OK")
</pallas_src>

<mosaic_0001>
module attributes {stable_mosaic.version = 11 : i64} {
  func.func @_fused_qk_proj_kernel(%arg0: i32, %arg1: i32, %arg2: memref<8x32xf32, #tpu.memory_space<vmem>>, %arg3: memref<32x64xf32, #tpu.memory_space<vmem>>, %arg4: memref<1x64xf32, #tpu.memory_space<vmem>>, %arg5: memref<8x64xf32, #tpu.memory_space<vmem>>) attributes {dimension_semantics = [#tpu.dimension_semantics<parallel>, #tpu.dimension_semantics<parallel>], iteration_bounds = array<i64: 2, 1>, scalar_prefetch = 0 : i64, scratch_operands = 0 : i64, tpu.core_type = #tpu.core_type<tc>, window_params = [{transform_indices = @transform_0, window_bounds = array<i64: 8, 32>}, {transform_indices = @transform_1, window_bounds = array<i64: 32, 64>}, {transform_indices = @transform_2, window_bounds = array<i64: 1, 64>}, {transform_indices = @transform_3, window_bounds = array<i64: 8, 64>}]} {
    %c0 = arith.constant 0 : index
    %c0_0 = arith.constant 0 : index
    %0 = vector.load %arg2[%c0, %c0_0] : memref<8x32xf32, #tpu.memory_space<vmem>>, vector<8x32xf32>
    %c0_1 = arith.constant 0 : index
    %c0_2 = arith.constant 0 : index
    %1 = vector.load %arg3[%c0_1, %c0_2] : memref<32x64xf32, #tpu.memory_space<vmem>>, vector<32x64xf32>
    %cst = arith.constant dense<0.000000e+00> : vector<8x64xf32>
    %2 = tpu.matmul %0, %1, %cst {dimension_numbers = #tpu.dot_dimension_numbers<[1], [0], [0], [1], [0, 0, 1, 1], [], []>} : vector<8x32xf32>, vector<32x64xf32>, vector<8x64xf32> -> vector<8x64xf32>
    %c0_3 = arith.constant 0 : index
    %c0_4 = arith.constant 0 : index
    %3 = vector.load %arg4[%c0_3, %c0_4] : memref<1x64xf32, #tpu.memory_space<vmem>>, vector<1x64xf32>
    %4 = vector.broadcast %3 : vector<1x64xf32> to vector<8x64xf32>
    %5 = arith.addf %2, %4 : vector<8x64xf32>
    %c0_5 = arith.constant 0 : index
    %c0_6 = arith.constant 0 : index
    %6 = vector.load %arg5[%c0_5, %c0_6] : memref<8x64xf32, #tpu.memory_space<vmem>>, vector<8x64xf32>
    tpu.vector_store %arg5[%c0_5, %c0_6], %5 {strides = array<i32>} : memref<8x64xf32, #tpu.memory_space<vmem>>, vector<8x64xf32>,
    return
  }
  func.func @transform_0(%arg0: i32, %arg1: i32) -> (i32, i32) {
    %c0_i32 = arith.constant 0 : i32
    %c0_i32_0 = arith.constant 0 : i32
    return %arg0, %c0_i32 : i32, i32
  }
  func.func @transform_1(%arg0: i32, %arg1: i32) -> (i32, i32) {
    %c0_i32 = arith.constant 0 : i32
    %c0_i32_0 = arith.constant 0 : i32
    return %c0_i32, %arg1 : i32, i32
  }
  func.func @transform_2(%arg0: i32, %arg1: i32) -> (i32, i32) {
    %c0_i32 = arith.constant 0 : i32
    %c0_i32_0 = arith.constant 0 : i32
    return %c0_i32, %arg1 : i32, i32
  }
  func.func @transform_3(%arg0: i32, %arg1: i32) -> (i32, i32) {
    %c0_i32 = arith.constant 0 : i32
    return %arg0, %arg1 : i32, i32
  }
}

</mosaic_0001>

<llo_original>
// kernel: multi_head_attention_layer_forward.1
$region0: #{multi_head_attention_layer_forward.1}
  #allocation0 [shape = 'u32[]', space=smem, size = 0x4, offset = 0x4, fixed_abs, tag = 'smem constant byte address 0x4 - core index']
  #allocation1 [shape = 'u32[72,128]{1,0:T(1,128)}', space=vmem, size = 0x9000, scoped, tag = 'internal scratch']
  %s0 = inlined_call_operand.vmem [shape: f32[16,32], index: 0, kind: input, shape index: {}]
  %s1 = inlined_call_operand.vmem [shape: f32[32,64], index: 1, kind: input, shape index: {}]
  %s2 = inlined_call_operand.vmem [shape: f32[1,64], index: 2, kind: input, shape index: {}]
  %s3 = inlined_call_operand.vmem [shape: f32[16,64], index: 3, kind: output, shape index: {}]
  %s4 = sld [smem:[#allocation0]]
  $region45: #{multi_head_attention_layer_forward.1} parent=0
    _
  %s6 = ssub.s32 1, %s4
  %s7 = scalar_select 0, %s6, %s4
  loop: start=0, step=1, limit=4
  $region2: #{multi_head_attention_layer_forward.1} parent=0 // loop_pre_header
    _
  $region3: #{multi_head_attention_layer_forward.1} parent=0 // loop_header
    %s9 = sphi 0, %s13
    %p10 = scmp.ge.s32.totalorder %s9, 4
    %s16 = sphi 0, %s28
    %s17 = sphi 0, %s24
    %s18 = sphi 0, %s16
    %s19 = sphi 0, %s17
    %s20 = sphi 0, %s18
    %s21 = sphi 0, %s19
    %s31 = sphi 0, %s33
    %s34 = sphi 0, %s31
    %s35 = sphi 0, %s34
    %s51 = sphi 0, %s35
    %s57 = sphi 0, %s59
    %s60 = sphi 0, %s57
    %s61 = sphi 0, %s60
    %s77 = sphi 0, %s61
    %s83 = sphi 0, %s85
    %s86 = sphi 0, %s83
    %s87 = sphi 0, %s86
    %s103 = sphi 0, %s87
    %s111 = sphi 0, %s113
    %s114 = sphi 0, %s111
    %s115 = sphi 0, %s114
    %s131 = sphi 0, %s115
  $region4: #{multi_head_attention_layer_forward.1} parent=0 // loop_header_branch
    %12 = sbr.rel (%p10) target = $region8
  $region5: #{multi_head_attention_layer_forward.1} parent=0 // loop_body
    %s14 = ssub.s32 %s9, 1
    %s15 = ssub.s32 %s9, 2
    %s22 = sadd.s32 1, %s17
    %p23 = scmp.ge.s32.totalorder %s22, 1
    %s24 = scalar_select %p23, 0, %s22
    %s25 = sadd.s32 1, %s16
    %s26 = scalar_select %p23, %s25, %s16
    %p27 = scmp.ge.s32.totalorder %s26, 2
    %s28 = scalar_select %p27, 0, %s26
    %s29 = ssub.s32 %s16, %s28
    %p30 = scmp.eq.s32.totalorder %s29, 0
    %s32 = sadd.s32 %s31, 1
    %s33 = scalar_select %p30, %s31, %s32
    %p36 = pneg %p30
    %p37 = scmp.eq.s32.totalorder %s9, 1
    %p38 = por %p36, %p37
    %p39 = scmp.ne.s32.totalorder %s31, %s34
    %p40 = scmp.eq.s32.totalorder %s9, 0
    %p41 = por %p39, %p40
    %p42 = scmp.ne.s32.totalorder %s31, %s34
    %p43 = scmp.eq.s32.totalorder %s14, 1
    %p44 = por %p42, %p43
    %p45 = scmp.ne.s32.totalorder %s34, %s35
    %p46 = scmp.eq.s32.totalorder %s14, 0
    %p47 = por %p45, %p46
    %p48 = scmp.ne.s32.totalorder %s34, %s35
    %p49 = scmp.eq.s32.totalorder %s15, 1
    %p50 = por %p48, %p49
    %p52 = scmp.ne.s32.totalorder %s35, %s51
    %p53 = scmp.eq.s32.totalorder %s15, 0
    %p54 = por %p52, %p53
    %s55 = ssub.s32 %s17, %s24
    %p56 = scmp.eq.s32.totalorder %s55, 0
    %s58 = sadd.s32 %s57, 1
    %s59 = scalar_select %p56, %s57, %s58
    %p62 = pneg %p56
    %p63 = scmp.eq.s32.totalorder %s9, 1
    %p64 = por %p62, %p63
    %p65 = scmp.ne.s32.totalorder %s57, %s60
    %p66 = scmp.eq.s32.totalorder %s9, 0
    %p67 = por %p65, %p66
    %p68 = scmp.ne.s32.totalorder %s57, %s60
    %p69 = scmp.eq.s32.totalorder %s14, 1
    %p70 = por %p68, %p69
    %p71 = scmp.ne.s32.totalorder %s60, %s61
    %p72 = scmp.eq.s32.totalorder %s14, 0
    %p73 = por %p71, %p72
    %p74 = scmp.ne.s32.totalorder %s60, %s61
    %p75 = scmp.eq.s32.totalorder %s15, 1
    %p76 = por %p74, %p75
    %p78 = scmp.ne.s32.totalorder %s61, %s77
    %p79 = scmp.eq.s32.totalorder %s15, 0
    %p80 = por %p78, %p79
    %s81 = ssub.s32 %s17, %s24
    %p82 = scmp.eq.s32.totalorder %s81, 0
    %s84 = sadd.s32 %s83, 1
    %s85 = scalar_select %p82, %s83, %s84
    %p88 = pneg %p82
    %p89 = scmp.eq.s32.totalorder %s9, 1
    %p90 = por %p88, %p89
    %p91 = scmp.ne.s32.totalorder %s83, %s86
    %p92 = scmp.eq.s32.totalorder %s9, 0
    %p93 = por %p91, %p92
    %p94 = scmp.ne.s32.totalorder %s83, %s86
    %p95 = scmp.eq.s32.totalorder %s14, 1
    %p96 = por %p94, %p95
    %p97 = scmp.ne.s32.totalorder %s86, %s87
    %p98 = scmp.eq.s32.totalorder %s14, 0
    %p99 = por %p97, %p98
    %p100 = scmp.ne.s32.totalorder %s86, %s87
    %p101 = scmp.eq.s32.totalorder %s15, 1
    %p102 = por %p100, %p101
    %p104 = scmp.ne.s32.totalorder %s87, %s103
    %p105 = scmp.eq.s32.totalorder %s15, 0
    %p106 = por %p104, %p105
    %s107 = ssub.s32 %s16, %s28
    %s108 = ssub.s32 %s17, %s24
    %s109 = sor.u32 %s107, %s108
    %p110 = scmp.eq.s32.totalorder %s109, 0
    %s112 = sadd.s32 %s111, 1
    %s113 = scalar_select %p110, %s111, %s112
    %p116 = pneg %p110
    %p117 = scmp.eq.s32.totalorder %s9, 1
    %p118 = por %p116, %p117
    %p119 = scmp.ne.s32.totalorder %s111, %s114
    %p120 = scmp.eq.s32.totalorder %s9, 0
    %p121 = por %p119, %p120
    %p122 = scmp.ne.s32.totalorder %s111, %s114
    %p123 = scmp.eq.s32.totalorder %s14, 1
    %p124 = por %p122, %p123
    %p125 = scmp.ne.s32.totalorder %s114, %s115
    %p126 = scmp.eq.s32.totalorder %s14, 0
    %p127 = por %p125, %p126
    %p128 = scmp.ne.s32.totalorder %s114, %s115
    %p129 = scmp.eq.s32.totalorder %s15, 1
    %p130 = por %p128, %p129
    %p132 = scmp.ne.s32.totalorder %s115, %s131
    %p133 = scmp.eq.s32.totalorder %s15, 0
    %p134 = por %p132, %p133
    %p135 = scmp.le.s32.totalorder 1, %s9
    %p136 = scmp.lt.s32.totalorder %s9, 3
    %p137 = pnand %p135, %p136
    %p138 = pneg %p137
    // Predicated region
    $region9: #{multi_head_attention_layer_forward.1} parent=5 // pred_check
      _
    $region10: #{multi_head_attention_layer_forward.1} parent=5 // pred_check_branch
      %140 = sbr.rel (%p137) target = $region12
    $region11: #{multi_head_attention_layer_forward.1} parent=5 // pred_region
      %s141 = ssub.s32 %s9, 1
      // Predicated region
      $region13: #{multi_head_attention_layer_forward.1} parent=11 // pred_check
        %p142 = pneg %p73
      $region14: #{multi_head_attention_layer_forward.1} parent=11 // pred_check_branch
        %144 = sbr.rel (%p142) target = $region16
      $region15: #{multi_head_attention_layer_forward.1} parent=11 // pred_region
        %p145 = scmp.lt.s32.totalorder %s19, 0
        %s146 = scalar_select %p145, %s19, 0
        %s147 = smul.addr %s146, 8
        %s148 = scalar_lea.vmem %s1, %s147
      $region16: #{multi_head_attention_layer_forward.1} parent=11 // pred_fallthru
        _
      // Predicated region
      $region17: #{multi_head_attention_layer_forward.1} parent=11 // pred_check
        %p149 = pneg %p99
      $region18: #{multi_head_attention_layer_forward.1} parent=11 // pred_check_branch
        %151 = sbr.rel (%p149) target = $region20
      $region19: #{multi_head_attention_layer_forward.1} parent=11 // pred_region
        %p152 = scmp.lt.s32.totalorder %s19, 0
        %s153 = scalar_select %p152, %s19, 0
        %s154 = scalar_lea.vmem %s2, %s153
      $region20: #{multi_head_attention_layer_forward.1} parent=11 // pred_fallthru
        _
    $region12: #{multi_head_attention_layer_forward.1} parent=5 // pred_fallthru
      _
    %p155 = scmp.lt.s32.totalorder %s9, 2
    // Predicated region
    $region21: #{multi_head_attention_layer_forward.1} parent=5 // pred_check
      %p156 = pneg %p155
    $region22: #{multi_head_attention_layer_forward.1} parent=5 // pred_check_branch
      %158 = sbr.rel (%p156) target = $region24
    $region23: #{multi_head_attention_layer_forward.1} parent=5 // pred_region
      // Predicated region
      $region25: #{multi_head_attention_layer_forward.1} parent=23 // pred_check
        %p159 = pneg %p41
      $region26: #{multi_head_attention_layer_forward.1} parent=23 // pred_check_branch
        %161 = sbr.rel (%p159) target = $region28
      $region27: #{multi_head_attention_layer_forward.1} parent=23 // pred_region
        %p162 = scmp.lt.s32.totalorder %s16, 1
        %s163 = scalar_select %p162, %s16, 1
        %s164 = smul.addr %s163, 8
        %s165 = scalar_lea.vmem %s0, %s164
      $region28: #{multi_head_attention_layer_forward.1} parent=23 // pred_fallthru
        _
    $region24: #{multi_head_attention_layer_forward.1} parent=5 // pred_fallthru
      _
    %p166 = scmp.le.s32.totalorder 1, %s9
    %p167 = scmp.lt.s32.totalorder %s9, 3
    %p168 = pnand %p166, %p167
    %p169 = pneg %p168
    // Predicated region
    $region29: #{multi_head_attention_layer_forward.1} parent=5 // pred_check
      _
    $region30: #{multi_head_attention_layer_forward.1} parent=5 // pred_check_branch
      %171 = sbr.rel (%p168) target = $region32
    $region31: #{multi_head_attention_layer_forward.1} parent=5 // pred_region
      %s172 = ssub.s32 %s9, 1
      %p173 = scmp.lt.s32.totalorder %s18, 1
      %s174 = scalar_select %p173, %s18, 1
      %s175 = smul.addr %s174, 8
      %s176 = scalar_lea.vmem %s0, %s175
      %p177 = pneg %p47
      %p178 = pneg %p44
      %p179 = scmp.lt.s32.totalorder %s19, 0
      %s180 = scalar_select %p179, %s19, 0
      %s181 = smul.addr %s180, 8
      %s182 = scalar_lea.vmem %s1, %s181
      %p183 = pneg %p73
      %p184 = pneg %p70
      %p185 = scmp.lt.s32.totalorder %s19, 0
      %s186 = scalar_select %p185, %s19, 0
      %s187 = scalar_lea.vmem %s2, %s186
      %p188 = pneg %p99
      %p189 = pneg %p96
      %p190 = pneg %p127
      %p191 = pneg %p124
      %p192 = scmp.lt.s32.totalorder %s18, 1
      %s193 = scalar_select %p192, %s18, 1
      %p194 = scmp.lt.s32.totalorder %s19, 0
      %s195 = scalar_select %p194, %s19, 0
      %s196 = sadd.s32 %s195, %s193
      %s197 = smul.addr %s196, 8
      %s198 = scalar_lea.vmem %s3, %s197
      %p199 = scmp.lt.s32.totalorder %s18, 1
      %s200 = scalar_select %p199, %s18, 1
      %s201 = smul.addr %s200, 8
      %s202 = scalar_lea.vmem %s0, %s201
      %p203 = scmp.lt.s32.totalorder %s19, 0
      %s204 = scalar_select %p203, %s19, 0
      %s205 = smul.addr %s204, 8
      %s206 = scalar_lea.vmem %s1, %s205
      %p207 = scmp.lt.s32.totalorder %s19, 0
      %s208 = scalar_select %p207, %s19, 0
      %s209 = scalar_lea.vmem %s2, %s208
      %p210 = scmp.lt.s32.totalorder %s18, 1
      %s211 = scalar_select %p210, %s18, 1
      %p212 = scmp.lt.s32.totalorder %s19, 0
      %s213 = scalar_select %p212, %s19, 0
      %s214 = sadd.s32 %s213, %s211
      %s215 = smul.addr %s214, 8
      %s216 = scalar_lea.vmem %s3, %s215
      %v217 = vld [vmem:[%s202] sm:$0xff]
      %v218 = vld [vmem:[%s206] sm:$0xff]
      %v219 = vld [vmem:[%s206 + $0x8] sm:$0xff]
      %v220 = vld [vmem:[%s206 + $0x10] sm:$0xff]
      %v221 = vld [vmem:[%s206 + $0x18] sm:$0xff]
      %v222 = vld [vmem:[%s209] sm:$0x1]
      %v224 = vperm.slane %v222, 0
      %vm226 = vcmask 261120
      %v228 = vsel %vm226, %v217, 0
      %230 = vmatpush.msra.mxu0 0.0
      %231 = vmatpush.msra.mxu0 0.0
      %232 = vmatpush.msra.mxu0 0.0
      %233 = vmatpush.msra.mxu0 0.0
      %234 = vmatpush.msra.mxu0 0.0
      %235 = vmatpush.msra.mxu0 0.0
      %236 = vmatpush.msra.mxu0 0.0
      %237 = vmatpush.msra.mxu0 0.0
      %238 = vmatpush.msra.mxu0 0.0
      %239 = vmatpush.msra.mxu0 0.0
      %240 = vmatpush.msra.mxu0 0.0
      %241 = vmatpush.msra.mxu0 0.0
      %242 = vmatpush.msra.mxu0 %v221
      %243 = vmatpush.msra.mxu0 %v220
      %244 = vmatpush.msra.mxu0 %v219
      %245 = vmatpush.msra.mxu0 %v218
      %246 = vmatmul.f32.gmra.mxu0 %v228
      %v247 = vpop.f32.mrf.mxu0
      %v248 = vadd.f32 %v224, %v247
      %249 = vdwg.mxu0
      %vm250 = vcmask 523264
      %251 = vst.msk [vmem:[%s216] sm:$0xff] %vm250, %v248
      %p252 = scmp.lt.s32.totalorder %s18, 1
      %s253 = scalar_select %p252, %s18, 1
      %p254 = scmp.lt.s32.totalorder %s19, 0
      %s255 = scalar_select %p254, %s19, 0
      %s256 = sadd.s32 %s255, %s253
      %s257 = smul.addr %s256, 8
      %s258 = scalar_lea.vmem %s3, %s257
      // Predicated region
      $region33: #{multi_head_attention_layer_forward.1} parent=31 // pred_check
        %p259 = pneg %p124
      $region34: #{multi_head_attention_layer_forward.1} parent=31 // pred_check_branch
        %261 = sbr.rel (%p259) target = $region36
      $region35: #{multi_head_attention_layer_forward.1} parent=31 // pred_region
        _
      $region36: #{multi_head_attention_layer_forward.1} parent=31 // pred_fallthru
        _
    $region32: #{multi_head_attention_layer_forward.1} parent=5 // pred_fallthru
      _
    %p262 = scmp.le.s32.totalorder 2, %s9
    // Predicated region
    $region37: #{multi_head_attention_layer_forward.1} parent=5 // pred_check
      %p263 = pneg %p262
    $region38: #{multi_head_attention_layer_forward.1} parent=5 // pred_check_branch
      %265 = sbr.rel (%p263) target = $region40
    $region39: #{multi_head_attention_layer_forward.1} parent=5 // pred_region
      %s266 = ssub.s32 %s9, 2
      // Predicated region
      $region41: #{multi_head_attention_layer_forward.1} parent=39 // pred_check
        %p267 = pneg %p130
      $region42: #{multi_head_attention_layer_forward.1} parent=39 // pred_check_branch
        %269 = sbr.rel (%p267) target = $region44
      $region43: #{multi_head_attention_layer_forward.1} parent=39 // pred_region
        %p270 = scmp.lt.s32.totalorder %s20, 1
        %s271 = scalar_select %p270, %s20, 1
        %p272 = scmp.lt.s32.totalorder %s21, 0
        %s273 = scalar_select %p272, %s21, 0
        %s274 = sadd.s32 %s273, %s271
        %s275 = smul.addr %s274, 8
        %s276 = scalar_lea.vmem %s3, %s275
      $region44: #{multi_head_attention_layer_forward.1} parent=39 // pred_fallthru
        _
    $region40: #{multi_head_attention_layer_forward.1} parent=5 // pred_fallthru
      _
  $region6: #{multi_head_attention_layer_forward.1} parent=0 // loop_footer
    %s13 = sadd.s32 1, %s9
  $region7: #{multi_head_attention_layer_forward.1} parent=0 // loop_footer_branch
    %8 = sbr.rel target = $region3
  $region8: #{multi_head_attention_layer_forward.1} parent=0 // loop_exit
    _

</llo_original>
